<compile_context>
chip_gen: v7x
topology: tpu7x:2x2x1
jax: 0.10.0
libtpu: 0.0.40
codegen_flags: <defaults>
</compile_context>

<pallas_src>
import math

import jax
import jax.numpy as jnp
from jax.experimental import pallas as pl
from jax.experimental.pallas import tpu as pltpu


def _broadcast_kernel(spatial_ref, out_ref):
    # spatial_ref: (1, N*D) VMEM tile  (flattened spatial embedding, lane-dense)
    # out_ref:     (ROW_TILE, N*D) VMEM tile of the output slab
    out_ref[...] = jnp.broadcast_to(spatial_ref[...], out_ref.shape)


def _choose_row_tile(rows, cols, itemsize, target_bytes=4 * 1024 * 1024):
    """Pick a row tile: the whole slab if small, otherwise a multiple-of-8
    divisor of `rows` whose block is roughly `target_bytes`."""
    max_rows = max(1, target_bytes // (cols * itemsize))
    if rows <= max_rows:
        return rows
    tile = max(8, (max_rows // 8) * 8)
    while tile > 8 and rows % tile != 0:
        tile -= 8
    if rows % tile != 0:
        # No suitable multiple-of-8 divisor: fall back to one big block.
        tile = rows
    return tile


def spatio_temporal_positional_encoding(spatial_embedding, batch_size, time_steps):
    """Returns (batch_size, time_steps, num_nodes, embed_dim): the spatial
    embedding broadcast over batch and time, materialized by a Pallas kernel."""
    num_nodes, embed_dim = spatial_embedding.shape
    dtype = spatial_embedding.dtype

    rows = batch_size * time_steps          # collapsed (B, T) axis
    cols = num_nodes * embed_dim            # lane-dense trailing axis (mult. of 128 when N*D is)
    itemsize = jnp.dtype(dtype).itemsize

    row_tile = _choose_row_tile(rows, cols, itemsize)
    grid = (rows // row_tile,)

    # Flatten the spatial embedding to one lane-dense row; this is the
    # contiguous layout of (N, D) so the reshape is free.
    spatial_row = spatial_embedding.reshape(1, cols)

    out_slab = pl.pallas_call(
        _broadcast_kernel,
        out_shape=jax.ShapeDtypeStruct((rows, cols), dtype),
        grid=grid,
        in_specs=[pl.BlockSpec((1, cols), lambda i: (0, 0))],
        out_specs=pl.BlockSpec((row_tile, cols), lambda i: (i, 0)),
        compiler_params=pltpu.CompilerParams(
            dimension_semantics=("parallel",),
        ),
    )(spatial_row)

    # Row-major (B*T, N*D) == row-major (B, T, N, D): free reshape.
    return out_slab.reshape(batch_size, time_steps, num_nodes, embed_dim)


def _xavier_uniform(key, shape, dtype=jnp.float32):
    # PyTorch xavier_uniform_ for a 2D tensor (fan_out, fan_in) = (shape[0], shape[1])
    fan_out, fan_in = shape[0], shape[1]
    bound = math.sqrt(6.0 / (fan_in + fan_out))
    return jax.random.uniform(key, shape, dtype=dtype, minval=-bound, maxval=bound)


if __name__ == "__main__":
    # Small, shape-consistent configuration
    batch_size = 2
    time_steps = 8
    num_nodes = 16
    embed_dim = 32

    key = jax.random.PRNGKey(0)
    k_spatial, k_temporal, k_fusion = jax.random.split(key, 3)

    # Deterministic parameter init mirroring the module's __init__.
    spatial_embedding = _xavier_uniform(k_spatial, (num_nodes, embed_dim))
    temporal_embedding = _xavier_uniform(k_temporal, (time_steps, embed_dim))  # unused in forward
    fusion_weight = _xavier_uniform(k_fusion, (1, embed_dim))                  # unused in forward

    out = spatio_temporal_positional_encoding(spatial_embedding, batch_size, time_steps)
    out = jax.block_until_ready(out)

    # Verify against the reference semantics (pure broadcast).
    ref = jnp.broadcast_to(
        spatial_embedding[None, None, :, :],
        (batch_size, time_steps, num_nodes, embed_dim),
    )
    assert out.shape == (batch_size, time_steps, num_nodes, embed_dim)
    assert jnp.array_equal(out, ref)

    print("KERNEL_OK")
</pallas_src>

<mosaic_0001>
module attributes {stable_mosaic.version = 11 : i64} {
  func.func @_broadcast_kernel(%arg0: i32, %arg1: memref<1x512xf32, #tpu.memory_space<vmem>>, %arg2: memref<16x512xf32, #tpu.memory_space<vmem>>) attributes {dimension_semantics = [#tpu.dimension_semantics<parallel>], iteration_bounds = array<i64: 1>, scalar_prefetch = 0 : i64, scratch_operands = 0 : i64, tpu.core_type = #tpu.core_type<tc>, window_params = [{pipeline_mode = #tpu.pipeline_mode<synchronous>, transform_indices = @transform_0, window_bounds = array<i64: 1, 512>}, {transform_indices = @transform_1, window_bounds = array<i64: 16, 512>}]} {
    %c0 = arith.constant 0 : index
    %c0_0 = arith.constant 0 : index
    %0 = vector.load %arg1[%c0, %c0_0] : memref<1x512xf32, #tpu.memory_space<vmem>>, vector<1x512xf32>
    %1 = vector.shape_cast %0 : vector<1x512xf32> to vector<1x512xf32>
    %2 = vector.broadcast %1 : vector<1x512xf32> to vector<16x512xf32>
    %c0_1 = arith.constant 0 : index
    %c0_2 = arith.constant 0 : index
    %3 = vector.load %arg2[%c0_1, %c0_2] : memref<16x512xf32, #tpu.memory_space<vmem>>, vector<16x512xf32>
    tpu.vector_store %arg2[%c0_1, %c0_2], %2 {strides = array<i32>} : memref<16x512xf32, #tpu.memory_space<vmem>>, vector<16x512xf32>,
    return
  }
  func.func @transform_0(%arg0: i32) -> (i32, i32) {
    %c0_i32 = arith.constant 0 : i32
    %c0_i32_0 = arith.constant 0 : i32
    %c0_i32_1 = arith.constant 0 : i32
    return %c0_i32, %c0_i32_0 : i32, i32
  }
  func.func @transform_1(%arg0: i32) -> (i32, i32) {
    %c0_i32 = arith.constant 0 : i32
    %c0_i32_0 = arith.constant 0 : i32
    return %arg0, %c0_i32 : i32, i32
  }
}

</mosaic_0001>

<llo_original>
// kernel: tpu_custom_call.1
$region0: #{tpu_custom_call.1}
  #allocation0 [shape = 'u32[]', space=smem, size = 0x4, offset = 0x4, fixed_abs, tag = 'smem constant byte address 0x4 - core index']
  #allocation1 [shape = 'u32[144,128]{1,0:T(1,128)}', space=vmem, size = 0x12000, scoped, tag = 'internal scratch']
  %s0 = inlined_call_operand.hbm [shape: f32[1,512], index: 0, kind: input, shape index: {}]
  %s1 = inlined_call_operand.hbm [shape: f32[16,512], index: 1, kind: output, shape index: {}]
  %s2 = sld [smem:[#allocation0]]
  $region18: #{tpu_custom_call.1} parent=0
    _
  %s4 = ssub.s32 1, %s2
  %s5 = scalar_select 0, %s4, %s2
  $region1: #{tpu_custom_call.1} parent=0
    #allocation2 [shape = 'u8[2048]{0}', space=vmem, size = 0x800, scoped, tag = 'input window, operand 0, single buffered']
    #allocation3 [shape = 's32[1]{0}', space=sflag, size = 0x4, scoped, tag = 'scoped memory for tpu_custom_call.1']
    #allocation4 [shape = 's32[1]{0}', space=sflag, size = 0x4, scoped, tag = 'scoped memory for tpu_custom_call.1']
    #allocation5 [shape = 'u8[32768]{0}', space=vmem, size = 0x8000, scoped, tag = 'output window, operand 0, single buffered']
    %6 = vsyncpa [#allocation3], 0
    %7 = vsyncpa [#allocation4], 0
    // Predicated region
    $region2: #{tpu_custom_call.1} parent=1 // pred_check
      _
    $region3: #{tpu_custom_call.1} parent=1 // pred_check_branch
      %9 = sbr.rel (0) target = $region5
    $region4: #{tpu_custom_call.1} parent=1 // pred_region
      %s11 = ssub.s32 64, 64
      %12 = vsyncadd [#allocation3], %s11
      %s14 = sshll.u32 [#allocation2], 4
      %s15 = int_to_ptr.vmem [resolvable:$true] %s14
      %17 = dma.hbm_to_vmem [thread:$0]  %s0, 64, %s15, [#allocation3]
    $region5: #{tpu_custom_call.1} parent=1 // pred_fallthru
      _
    // Predicated region
    $region6: #{tpu_custom_call.1} parent=1 // pred_check
      _
    $region7: #{tpu_custom_call.1} parent=1 // pred_check_branch
      %19 = sbr.rel (0) target = $region9
    $region8: #{tpu_custom_call.1} parent=1 // pred_region
      %20 = dma.done [#allocation3], 64
    $region9: #{tpu_custom_call.1} parent=1 // pred_fallthru
      _
    %v21 = vld [vmem:[#allocation2] sm:$0xf]
    %v23 = vlaneseq
    %v24 = vshrl.u32 %v23, 7
    %v25 = vsub.s32 0, %v24
    %v26 = vrot.slane %v21, %v25
    %v27 = vlaneseq
    %v28 = vshrl.u32 %v27, 7
    %v29 = vsub.s32 1, %v28
    %v30 = vrot.slane %v21, %v29
    %v31 = vlaneseq
    %v32 = vshrl.u32 %v31, 7
    %v33 = vsub.s32 2, %v32
    %v34 = vrot.slane %v21, %v33
    %v35 = vlaneseq
    %v36 = vshrl.u32 %v35, 7
    %v37 = vsub.s32 3, %v36
    %v38 = vrot.slane %v21, %v37
    %43 = vst [vmem:[#allocation5] sm:$0xff] %v26
    %44 = vst [vmem:[#allocation5 + $0x8] sm:$0xff] %v30
    %45 = vst [vmem:[#allocation5 + $0x10] sm:$0xff] %v34
    %46 = vst [vmem:[#allocation5 + $0x18] sm:$0xff] %v38
    %47 = vst [vmem:[#allocation5 + $0x20] sm:$0xff] %v26
    %48 = vst [vmem:[#allocation5 + $0x28] sm:$0xff] %v30
    %49 = vst [vmem:[#allocation5 + $0x30] sm:$0xff] %v34
    %50 = vst [vmem:[#allocation5 + $0x38] sm:$0xff] %v38
    // Predicated region
    $region10: #{tpu_custom_call.1} parent=1 // pred_check
      _
    $region11: #{tpu_custom_call.1} parent=1 // pred_check_branch
      %52 = sbr.rel (0) target = $region13
    $region12: #{tpu_custom_call.1} parent=1 // pred_region
      %s54 = ssub.s32 1024, 1024
      %55 = vsyncadd [#allocation4], %s54
      %s56 = sshll.u32 [#allocation5], 4
      %s57 = int_to_ptr.vmem [resolvable:$true] %s56
      %62 = dma.vmem_to_hbm [thread:$0]  %s57, 1024, %s1, [#allocation4], 512, 512, 32
    $region13: #{tpu_custom_call.1} parent=1 // pred_fallthru
      _
    // Predicated region
    $region14: #{tpu_custom_call.1} parent=1 // pred_check
      _
    $region15: #{tpu_custom_call.1} parent=1 // pred_check_branch
      %64 = sbr.rel (0) target = $region17
    $region16: #{tpu_custom_call.1} parent=1 // pred_region
      %65 = dma.done [#allocation4], 1024
    $region17: #{tpu_custom_call.1} parent=1 // pred_fallthru
      _
    %66 = vsyncpa [#allocation3], 1
    %67 = vsyncpa [#allocation4], 1

</llo_original>
